<compile_context>
chip_gen: v7x
topology: tpu7x:2x2x1
jax: 0.10.0
libtpu: 0.0.40
codegen_flags: <defaults>
</compile_context>

<pallas_src>
import functools

import jax
import jax.numpy as jnp
from jax.experimental import pallas as pl
from jax.experimental.pallas import tpu as pltpu


# ----------------------------------------------------------------------------
# in-kernel helpers (tiny matvecs on VPU/XLU; MXU deliberately avoided)
# ----------------------------------------------------------------------------
def _channel_gate(pooled, w1, b1, w2, b2):
    """pooled: (BN, C, 1) -> exp(sigmoid(fc2(relu(fc1(pooled))))) : (BN, C, 1)."""
    h = jnp.sum(pooled * w1, axis=1) + b1             # (BN, Cr)
    h = jnp.maximum(h, 0.0)                           # ReLU
    z = jnp.sum(h[:, None, :] * w2, axis=-1) + b2     # (BN, C)   (BN folded in)
    return jnp.exp(jax.nn.sigmoid(z))[:, :, None]     # (BN, C, 1)


def _spatial_gate(x, wsp, spb):
    """x: (BN, C, T) -> exp(sigmoid(1x1 conv C->1, BN folded)) : (BN, 1, T)."""
    sp = jnp.sum(x * wsp, axis=1, keepdims=True) + spb    # (BN, 1, T)
    return jnp.exp(jax.nn.sigmoid(sp))


# ----------------------------------------------------------------------------
# Path A: single-pass fused kernel, multiple batch samples per grid step
# ----------------------------------------------------------------------------
def _scse_fused_kernel(x_ref, w1_ref, b1_ref, w2_ref, b2_ref, wsp_ref, spb_ref,
                       o_ref, *, hw, hw_pad):
    # x_ref block: (BN, C, HWp); math in f32.
    x = x_ref[...].astype(jnp.float32)
    if hw_pad != hw:
        lane = jax.lax.broadcasted_iota(jnp.int32, (1, 1, hw_pad), 2)
        valid = lane < hw
        s = jnp.sum(jnp.where(valid, x, 0.0), axis=-1, keepdims=True)
        m = jnp.max(jnp.where(valid, x, -jnp.inf), axis=-1, keepdims=True)
    else:
        s = jnp.sum(x, axis=-1, keepdims=True)
        m = jnp.max(x, axis=-1, keepdims=True)
    pooled = s * (1.0 / hw) + m                        # avg-pool + max-pool, (BN, C, 1)
    ch_gate = _channel_gate(pooled, w1_ref[...], b1_ref[...], w2_ref[...], b2_ref[...])

    # Re-index x_ref for the streaming phase (keeps the pooled-stage value's
    # live range short; reloading from VMEM is cheap).
    x2 = x_ref[...].astype(jnp.float32)
    sp_gate = _spatial_gate(x2, wsp_ref[...], spb_ref[...])
    # fused combine: one add + one mul per element
    o_ref[...] = (x2 * (ch_gate + sp_gate)).astype(o_ref.dtype)


# ----------------------------------------------------------------------------
# Path B: two-pass HW-tiled kernels (large feature maps / small VMEM budget)
# ----------------------------------------------------------------------------
def _scse_stats_kernel(x_ref, sum_ref, max_ref, *, hw, tile):
    t = pl.program_id(1)

    @pl.when(t == 0)
    def _():
        sum_ref[...] = jnp.zeros_like(sum_ref)
        max_ref[...] = jnp.full_like(max_ref, -jnp.inf)

    x = x_ref[...].astype(jnp.float32)                 # (1, C, T)
    lane = t * tile + jax.lax.broadcasted_iota(jnp.int32, (1, 1, tile), 2)
    valid = lane < hw
    sum_ref[...] += jnp.sum(jnp.where(valid, x, 0.0), axis=-1, keepdims=True)
    max_ref[...] = jnp.maximum(
        max_ref[...],
        jnp.max(jnp.where(valid, x, -jnp.inf), axis=-1, keepdims=True))


def _scse_apply_kernel(sum_ref, max_ref, x_ref, w1_ref, b1_ref, w2_ref, b2_ref,
                       wsp_ref, spb_ref, o_ref, *, hw):
    x = x_ref[...].astype(jnp.float32)                 # (1, C, T)
    pooled = sum_ref[...] * (1.0 / hw) + max_ref[...]  # (1, C, 1)
    ch_gate = _channel_gate(pooled, w1_ref[...], b1_ref[...], w2_ref[...], b2_ref[...])
    sp_gate = _spatial_gate(x, wsp_ref[...], spb_ref[...])
    o_ref[...] = (x * (ch_gate + sp_gate)).astype(o_ref.dtype)


# ----------------------------------------------------------------------------
# parameter glue: fold eval-mode BatchNorms into the 1x1 convs
# ----------------------------------------------------------------------------
def _fold_batchnorms(params, C, Cr, eps):
    s_bn = params["bn1_gamma"] / jnp.sqrt(params["bn1_var"] + eps)            # (C,)
    t_bn = params["bn1_beta"] - params["bn1_mean"] * s_bn                     # (C,)
    w1_io = params["conv1_w"].reshape(Cr, C).T                                # (C, Cr) in,out
    b1 = params["conv1_b"].reshape(1, Cr)                                     # (1, Cr)
    w2f = params["conv2_w"].reshape(C, Cr) * s_bn[:, None]                    # (C, Cr) out,in
    b2f = (params["conv2_b"] * s_bn + t_bn).reshape(1, C)                     # (1, C)
    s_sp = params["bn2_gamma"] / jnp.sqrt(params["bn2_var"] + eps)            # (1,)
    t_sp = params["bn2_beta"] - params["bn2_mean"] * s_sp                     # (1,)
    wspf = (params["spconv_w"].reshape(1, C) * s_sp[:, None]).reshape(C, 1)   # (C, 1)
    spb = t_sp.reshape(1, 1)                                                  # (1, 1)
    return w1_io, b1, w2f, b2f, wspf, spb


# ----------------------------------------------------------------------------
# public wrapper (NCHW in / NCHW out, matching the PyTorch module)
# ----------------------------------------------------------------------------
def modified_scse_block(x_nchw, params, *, eps=1e-5, vmem_budget_bytes=16 << 20):
    """x_nchw: (N, C, H, W). Returns (N, C, H, W)."""
    N, C, H, W = x_nchw.shape
    HW = H * W
    HWp = ((HW + 127) // 128) * 128        # lane-align spatial dim (dense vst)
    Cr = params["conv1_w"].shape[0]
    itemsize = jnp.dtype(x_nchw.dtype).itemsize

    w1_io, b1, w2f, b2f, wspf, spb = _fold_batchnorms(params, C, Cr, eps)

    x3 = x_nchw.reshape(N, C, HW)
    if HWp != HW:
        x3 = jnp.pad(x3, ((0, 0), (0, 0), (0, HWp - HW)))

    per_sample_bytes = C * HWp * itemsize
    # advisory cost: mem-bound (read x once + write once), trivial flops
    cost = pl.CostEstimate(flops=6 * N * C * HW,
                           transcendentals=2 * N * (C + HW),
                           bytes_accessed=2 * N * C * HW * itemsize)

    if 4 * per_sample_bytes <= vmem_budget_bytes:
        # ---------- Path A: fused kernel, BN samples per grid step ----------
        target_block = 2 << 20                      # ~2 MiB blocks -> near HBM roofline
        bn = min(N,
                 vmem_budget_bytes // (4 * per_sample_bytes),
                 max(1, target_block // per_sample_bytes))
        bn = max(1, int(bn))
        grid = (pl.cdiv(N, bn),)
        block_bytes = bn * per_sample_bytes
        vmem_limit = int(min(64 << 20, 6 * block_bytes + (4 << 20)))
        wfull = lambda b: (0, 0)
        out = pl.pallas_call(
            functools.partial(_scse_fused_kernel, hw=HW, hw_pad=HWp),
            out_shape=jax.ShapeDtypeStruct((N, C, HWp), x_nchw.dtype),
            grid=grid,
            in_specs=[
                pl.BlockSpec((bn, C, HWp), lambda b: (b, 0, 0)),   # x
                pl.BlockSpec((C, Cr), wfull),                      # fc1 weight (in, out)
                pl.BlockSpec((1, Cr), wfull),                      # fc1 bias
                pl.BlockSpec((C, Cr), wfull),                      # fc2 weight (out, in), BN-folded
                pl.BlockSpec((1, C), wfull),                       # fc2 bias, BN-folded
                pl.BlockSpec((C, 1), wfull),                       # spatial conv weight, BN-folded
                pl.BlockSpec((1, 1), wfull),                       # spatial bias (BN shift)
            ],
            out_specs=pl.BlockSpec((bn, C, HWp), lambda b: (b, 0, 0)),
            compiler_params=pltpu.CompilerParams(
                dimension_semantics=("parallel",),
                vmem_limit_bytes=vmem_limit),
            cost_estimate=cost,
        )(x3, w1_io, b1, w2f, b2f, wspf, spb)
    else:
        # ---------- Path B: two-pass HW-tiled (large activations) -----------
        T = min(HWp, max(128, ((vmem_budget_bytes // (4 * C * itemsize)) // 128) * 128))
        grid = (N, pl.cdiv(HWp, T))
        wfull2 = lambda b, t: (0, 0)
        # pass 1: per-sample sum / max pooled stats (accumulated across HW tiles)
        x_sum, x_max = pl.pallas_call(
            functools.partial(_scse_stats_kernel, hw=HW, tile=T),
            out_shape=(jax.ShapeDtypeStruct((N, C, 1), jnp.float32),
                       jax.ShapeDtypeStruct((N, C, 1), jnp.float32)),
            grid=grid,
            in_specs=[pl.BlockSpec((1, C, T), lambda b, t: (b, 0, t))],
            out_specs=(pl.BlockSpec((1, C, 1), lambda b, t: (b, 0, 0)),
                       pl.BlockSpec((1, C, 1), lambda b, t: (b, 0, 0))),
            compiler_params=pltpu.CompilerParams(
                dimension_semantics=("parallel", "arbitrary"),
                vmem_limit_bytes=int(min(64 << 20, 4 * C * T * itemsize + (4 << 20)))),
        )(x3)
        # pass 2: apply channel + spatial gates, HW tile by HW tile
        out = pl.pallas_call(
            functools.partial(_scse_apply_kernel, hw=HW),
            out_shape=jax.ShapeDtypeStruct((N, C, HWp), x_nchw.dtype),
            grid=grid,
            in_specs=[
                pl.BlockSpec((1, C, 1), lambda b, t: (b, 0, 0)),   # pooled sum
                pl.BlockSpec((1, C, 1), lambda b, t: (b, 0, 0)),   # pooled max
                pl.BlockSpec((1, C, T), lambda b, t: (b, 0, t)),   # x tile
                pl.BlockSpec((C, Cr), wfull2),
                pl.BlockSpec((1, Cr), wfull2),
                pl.BlockSpec((C, Cr), wfull2),
                pl.BlockSpec((1, C), wfull2),
                pl.BlockSpec((C, 1), wfull2),
                pl.BlockSpec((1, 1), wfull2),
            ],
            out_specs=pl.BlockSpec((1, C, T), lambda b, t: (b, 0, t)),
            compiler_params=pltpu.CompilerParams(
                dimension_semantics=("parallel", "parallel"),
                vmem_limit_bytes=int(min(64 << 20, 6 * C * T * itemsize + (4 << 20)))),
            cost_estimate=cost,
        )(x_sum, x_max, x3, w1_io, b1, w2f, b2f, wspf, spb)

    if HWp != HW:
        out = out[:, :, :HW]
    return out.reshape(N, C, H, W)


# ----------------------------------------------------------------------------
# pure-JAX reference matching the PyTorch forward (eval-mode BN)
# ----------------------------------------------------------------------------
def _reference(x, p, eps=1e-5):
    N, C, H, W = x.shape
    Cr = p["conv1_w"].shape[0]
    pooled = x.mean(axis=(2, 3), keepdims=True) + x.max(axis=(2, 3), keepdims=True)
    h = jnp.einsum("nchw,oc->nohw", pooled, p["conv1_w"].reshape(Cr, C)) \
        + p["conv1_b"][None, :, None, None]
    h = jnp.maximum(h, 0.0)
    z = jnp.einsum("nchw,oc->nohw", h, p["conv2_w"].reshape(C, Cr)) \
        + p["conv2_b"][None, :, None, None]
    z = (z - p["bn1_mean"][None, :, None, None]) / jnp.sqrt(p["bn1_var"] + eps)[None, :, None, None] \
        * p["bn1_gamma"][None, :, None, None] + p["bn1_beta"][None, :, None, None]
    ch_att = x * jnp.exp(jax.nn.sigmoid(z))
    sp = jnp.einsum("nchw,oc->nohw", x, p["spconv_w"].reshape(1, C))
    sp = (sp - p["bn2_mean"][None, :, None, None]) / jnp.sqrt(p["bn2_var"] + eps)[None, :, None, None] \
        * p["bn2_gamma"][None, :, None, None] + p["bn2_beta"][None, :, None, None]
    sp_att = x * jnp.exp(jax.nn.sigmoid(sp))
    return ch_att + sp_att  # residual add in PyTorch code has no effect (result discarded)


def init_params(key, in_chns, reduct_ratio):
    C = in_chns
    Cr = in_chns // reduct_ratio
    ks = jax.random.split(key, 10)
    return {
        "conv1_w": 0.2 * jax.random.normal(ks[0], (Cr, C, 1, 1), jnp.float32),
        "conv1_b": 0.1 * jax.random.normal(ks[1], (Cr,), jnp.float32),
        "conv2_w": 0.2 * jax.random.normal(ks[2], (C, Cr, 1, 1), jnp.float32),
        "conv2_b": 0.1 * jax.random.normal(ks[3], (C,), jnp.float32),
        "bn1_gamma": 1.0 + 0.1 * jax.random.normal(ks[4], (C,), jnp.float32),
        "bn1_beta": 0.1 * jax.random.normal(ks[5], (C,), jnp.float32),
        "bn1_mean": 0.1 * jax.random.normal(ks[6], (C,), jnp.float32),
        "bn1_var": jnp.abs(1.0 + 0.1 * jax.random.normal(ks[7], (C,), jnp.float32)),
        "spconv_w": 0.2 * jax.random.normal(ks[8], (1, C, 1, 1), jnp.float32),
        "bn2_gamma": jnp.array([1.1], jnp.float32),
        "bn2_beta": jnp.array([0.05], jnp.float32),
        "bn2_mean": jnp.array([0.02], jnp.float32),
        "bn2_var": jnp.array([0.9], jnp.float32),
    }


if __name__ == "__main__":
    key = jax.random.PRNGKey(0)
    kx, kp, kx2 = jax.random.split(key, 3)

    N, C, H, W = 2, 16, 16, 16
    reduct_ratio = 4
    x = jax.random.normal(kx, (N, C, H, W), jnp.float32)
    params = init_params(kp, C, reduct_ratio)
    ref = _reference(x, params)

    # Path A: fused, batch-blocked kernel (whole batch in one grid step here).
    out = jax.block_until_ready(modified_scse_block(x, params))
    assert out.shape == ref.shape and out.dtype == ref.dtype
    assert jnp.allclose(out, ref, atol=1e-4, rtol=1e-4)

    # Path B: force the HW-tiled two-pass path (tiny VMEM budget) and re-check.
    out2 = jax.block_until_ready(modified_scse_block(x, params, vmem_budget_bytes=1))
    assert jnp.allclose(out2, ref, atol=1e-4, rtol=1e-4)

    # Non-lane-aligned spatial size exercises the pad + mask (mean/max) path.
    x_odd = jax.random.normal(kx2, (N, C, 10, 10), jnp.float32)
    out3 = jax.block_until_ready(modified_scse_block(x_odd, params))
    assert jnp.allclose(out3, _reference(x_odd, params), atol=1e-4, rtol=1e-4)

    print("KERNEL_OK")
</pallas_src>

<mosaic_0001>
module attributes {stable_mosaic.version = 11 : i64} {
  func.func @_scse_fused_kernel(%arg0: i32, %arg1: memref<2x16x256xf32, #tpu.memory_space<vmem>>, %arg2: memref<16x4xf32, #tpu.memory_space<vmem>>, %arg3: memref<1x4xf32, #tpu.memory_space<vmem>>, %arg4: memref<16x4xf32, #tpu.memory_space<vmem>>, %arg5: memref<1x16xf32, #tpu.memory_space<vmem>>, %arg6: memref<16x1xf32, #tpu.memory_space<vmem>>, %arg7: memref<1x1xf32, #tpu.memory_space<vmem>>, %arg8: memref<2x16x256xf32, #tpu.memory_space<vmem>>) attributes {dimension_semantics = [#tpu.dimension_semantics<parallel>], iteration_bounds = array<i64: 1>, scalar_prefetch = 0 : i64, scratch_operands = 0 : i64, tpu.core_type = #tpu.core_type<tc>, window_params = [{transform_indices = @transform_0, window_bounds = array<i64: 2, 16, 256>}, {pipeline_mode = #tpu.pipeline_mode<synchronous>, transform_indices = @transform_1, window_bounds = array<i64: 16, 4>}, {pipeline_mode = #tpu.pipeline_mode<synchronous>, transform_indices = @transform_2, window_bounds = array<i64: 1, 4>}, {pipeline_mode = #tpu.pipeline_mode<synchronous>, transform_indices = @transform_3, window_bounds = array<i64: 16, 4>}, {pipeline_mode = #tpu.pipeline_mode<synchronous>, transform_indices = @transform_4, window_bounds = array<i64: 1, 16>}, {pipeline_mode = #tpu.pipeline_mode<synchronous>, transform_indices = @transform_5, window_bounds = array<i64: 16, 1>}, {pipeline_mode = #tpu.pipeline_mode<synchronous>, transform_indices = @transform_6, window_bounds = array<i64: 1, 1>}, {transform_indices = @transform_7, window_bounds = array<i64: 2, 16, 256>}]} {
    %c0 = arith.constant 0 : index
    %c0_0 = arith.constant 0 : index
    %c0_1 = arith.constant 0 : index
    %0 = vector.load %arg1[%c0, %c0_0, %c0_1] : memref<2x16x256xf32, #tpu.memory_space<vmem>>, vector<2x16x256xf32>
    %cst = arith.constant dense<0.000000e+00> : vector<2x16xf32>
    %1 = vector.multi_reduction <add>, %0, %cst [2] : vector<2x16x256xf32> to vector<2x16xf32>
    %2 = vector.shape_cast %1 : vector<2x16xf32> to vector<2x16x1xf32>
    %cst_2 = arith.constant dense<0xFF800000> : vector<2x16xf32>
    %3 = vector.multi_reduction <maximumf>, %0, %cst_2 [2] : vector<2x16x256xf32> to vector<2x16xf32>
    %4 = vector.shape_cast %3 : vector<2x16xf32> to vector<2x16x1xf32>
    %cst_3 = arith.constant 3.906250e-03 : f32
    %5 = vector.broadcast %cst_3 : f32 to vector<2x16x1xf32>
    %6 = arith.mulf %2, %5 : vector<2x16x1xf32>
    %7 = arith.addf %6, %4 : vector<2x16x1xf32>
    %c0_4 = arith.constant 0 : index
    %c0_5 = arith.constant 0 : index
    %8 = vector.load %arg2[%c0_4, %c0_5] : memref<16x4xf32, #tpu.memory_space<vmem>>, vector<16x4xf32>
    %c0_6 = arith.constant 0 : index
    %c0_7 = arith.constant 0 : index
    %9 = vector.load %arg3[%c0_6, %c0_7] : memref<1x4xf32, #tpu.memory_space<vmem>>, vector<1x4xf32>
    %c0_8 = arith.constant 0 : index
    %c0_9 = arith.constant 0 : index
    %10 = vector.load %arg4[%c0_8, %c0_9] : memref<16x4xf32, #tpu.memory_space<vmem>>, vector<16x4xf32>
    %c0_10 = arith.constant 0 : index
    %c0_11 = arith.constant 0 : index
    %11 = vector.load %arg5[%c0_10, %c0_11] : memref<1x16xf32, #tpu.memory_space<vmem>>, vector<1x16xf32>
    %12 = vector.shape_cast %8 : vector<16x4xf32> to vector<1x16x4xf32>
    %13 = vector.broadcast %7 : vector<2x16x1xf32> to vector<2x16x4xf32>
    %14 = vector.broadcast %12 : vector<1x16x4xf32> to vector<2x16x4xf32>
    %15 = arith.mulf %13, %14 : vector<2x16x4xf32>
    %cst_12 = arith.constant dense<0.000000e+00> : vector<2x4xf32>
    %16 = vector.multi_reduction <add>, %15, %cst_12 [1] : vector<2x16x4xf32> to vector<2x4xf32>
    %17 = vector.broadcast %9 : vector<1x4xf32> to vector<2x4xf32>
    %18 = arith.addf %16, %17 : vector<2x4xf32>
    %cst_13 = arith.constant 0.000000e+00 : f32
    %19 = vector.broadcast %cst_13 : f32 to vector<2x4xf32>
    %20 = arith.maximumf %18, %19 : vector<2x4xf32>
    %21 = vector.shape_cast %20 : vector<2x4xf32> to vector<2x1x4xf32>
    %22 = vector.shape_cast %10 : vector<16x4xf32> to vector<1x16x4xf32>
    %23 = vector.broadcast %21 : vector<2x1x4xf32> to vector<2x16x4xf32>
    %24 = vector.broadcast %22 : vector<1x16x4xf32> to vector<2x16x4xf32>
    %25 = arith.mulf %23, %24 : vector<2x16x4xf32>
    %cst_14 = arith.constant dense<0.000000e+00> : vector<2x16xf32>
    %26 = vector.multi_reduction <add>, %25, %cst_14 [2] : vector<2x16x4xf32> to vector<2x16xf32>
    %27 = vector.broadcast %11 : vector<1x16xf32> to vector<2x16xf32>
    %28 = arith.addf %26, %27 : vector<2x16xf32>
    %29 = arith.negf %28 : vector<2x16xf32>
    %30 = math.exp %29 : vector<2x16xf32>
    %cst_15 = arith.constant 1.000000e+00 : f32
    %31 = vector.broadcast %cst_15 : f32 to vector<2x16xf32>
    %32 = arith.addf %31, %30 : vector<2x16xf32>
    %33 = arith.divf %31, %32 : vector<2x16xf32>
    %34 = math.exp %33 : vector<2x16xf32>
    %35 = vector.shape_cast %34 : vector<2x16xf32> to vector<2x16x1xf32>
    %c0_16 = arith.constant 0 : index
    %c0_17 = arith.constant 0 : index
    %c0_18 = arith.constant 0 : index
    %36 = vector.load %arg1[%c0_16, %c0_17, %c0_18] : memref<2x16x256xf32, #tpu.memory_space<vmem>>, vector<2x16x256xf32>
    %c0_19 = arith.constant 0 : index
    %c0_20 = arith.constant 0 : index
    %37 = vector.load %arg6[%c0_19, %c0_20] : memref<16x1xf32, #tpu.memory_space<vmem>>, vector<16x1xf32>
    %c0_21 = arith.constant 0 : index
    %c0_22 = arith.constant 0 : index
    %38 = vector.load %arg7[%c0_21, %c0_22] : memref<1x1xf32, #tpu.memory_space<vmem>>, vector<1x1xf32>
    %39 = vector.shape_cast %37 : vector<16x1xf32> to vector<1x16x1xf32>
    %40 = vector.broadcast %39 : vector<1x16x1xf32> to vector<2x16x256xf32>
    %41 = arith.mulf %36, %40 : vector<2x16x256xf32>
    %cst_23 = arith.constant dense<0.000000e+00> : vector<2x256xf32>
    %42 = vector.multi_reduction <add>, %41, %cst_23 [1] : vector<2x16x256xf32> to vector<2x256xf32>
    %43 = vector.shape_cast %42 : vector<2x256xf32> to vector<2x1x256xf32>
    %44 = vector.shape_cast %38 : vector<1x1xf32> to vector<1x1x1xf32>
    %45 = vector.broadcast %44 : vector<1x1x1xf32> to vector<2x1x256xf32>
    %46 = arith.addf %43, %45 : vector<2x1x256xf32>
    %47 = arith.negf %46 : vector<2x1x256xf32>
    %48 = math.exp %47 : vector<2x1x256xf32>
    %cst_24 = arith.constant 1.000000e+00 : f32
    %49 = vector.broadcast %cst_24 : f32 to vector<2x1x256xf32>
    %50 = arith.addf %49, %48 : vector<2x1x256xf32>
    %51 = arith.divf %49, %50 : vector<2x1x256xf32>
    %52 = math.exp %51 : vector<2x1x256xf32>
    %53 = vector.broadcast %35 : vector<2x16x1xf32> to vector<2x16x256xf32>
    %54 = vector.broadcast %52 : vector<2x1x256xf32> to vector<2x16x256xf32>
    %55 = arith.addf %53, %54 : vector<2x16x256xf32>
    %56 = arith.mulf %36, %55 : vector<2x16x256xf32>
    %c0_25 = arith.constant 0 : index
    %c0_26 = arith.constant 0 : index
    %c0_27 = arith.constant 0 : index
    %57 = vector.load %arg8[%c0_25, %c0_26, %c0_27] : memref<2x16x256xf32, #tpu.memory_space<vmem>>, vector<2x16x256xf32>
    tpu.vector_store %arg8[%c0_25, %c0_26, %c0_27], %56 {strides = array<i32>} : memref<2x16x256xf32, #tpu.memory_space<vmem>>, vector<2x16x256xf32>,
    return
  }
  func.func @transform_0(%arg0: i32) -> (i32, i32, i32) {
    %c0_i32 = arith.constant 0 : i32
    %c0_i32_0 = arith.constant 0 : i32
    %c0_i32_1 = arith.constant 0 : i32
    return %arg0, %c0_i32, %c0_i32_0 : i32, i32, i32
  }
  func.func @transform_1(%arg0: i32) -> (i32, i32) {
    %c0_i32 = arith.constant 0 : i32
    %c0_i32_0 = arith.constant 0 : i32
    %c0_i32_1 = arith.constant 0 : i32
    return %c0_i32, %c0_i32_0 : i32, i32
  }
  func.func @transform_2(%arg0: i32) -> (i32, i32) {
    %c0_i32 = arith.constant 0 : i32
    %c0_i32_0 = arith.constant 0 : i32
    %c0_i32_1 = arith.constant 0 : i32
    return %c0_i32, %c0_i32_0 : i32, i32
  }
  func.func @transform_3(%arg0: i32) -> (i32, i32) {
    %c0_i32 = arith.constant 0 : i32
    %c0_i32_0 = arith.constant 0 : i32
    %c0_i32_1 = arith.constant 0 : i32
    return %c0_i32, %c0_i32_0 : i32, i32
  }
  func.func @transform_4(%arg0: i32) -> (i32, i32) {
    %c0_i32 = arith.constant 0 : i32
    %c0_i32_0 = arith.constant 0 : i32
    %c0_i32_1 = arith.constant 0 : i32
    return %c0_i32, %c0_i32_0 : i32, i32
  }
  func.func @transform_5(%arg0: i32) -> (i32, i32) {
    %c0_i32 = arith.constant 0 : i32
    %c0_i32_0 = arith.constant 0 : i32
    %c0_i32_1 = arith.constant 0 : i32
    return %c0_i32, %c0_i32_0 : i32, i32
  }
  func.func @transform_6(%arg0: i32) -> (i32, i32) {
    %c0_i32 = arith.constant 0 : i32
    %c0_i32_0 = arith.constant 0 : i32
    %c0_i32_1 = arith.constant 0 : i32
    return %c0_i32, %c0_i32_0 : i32, i32
  }
  func.func @transform_7(%arg0: i32) -> (i32, i32, i32) {
    %c0_i32 = arith.constant 0 : i32
    %c0_i32_0 = arith.constant 0 : i32
    %c0_i32_1 = arith.constant 0 : i32
    return %arg0, %c0_i32, %c0_i32_0 : i32, i32, i32
  }
}

</mosaic_0001>

<llo_original>
// kernel: tpu_custom_call.1
$region0: #{tpu_custom_call.1}
  #allocation0 [shape = 'u32[]', space=smem, size = 0x4, offset = 0x4, fixed_abs, tag = 'smem constant byte address 0x4 - core index']
  #allocation1 [shape = 'u32[144,128]{1,0:T(1,128)}', space=vmem, size = 0x12000, scoped, tag = 'internal scratch']
  #allocation2 [shape = 'f32[1,1]{1,0:T(1,128)S(1)}', space=vmem, size = 0x200, scoped, tag = 'scoped memory for tpu_custom_call.1']
  %s0 = inlined_call_operand.hbm [shape: f32[2,16,256], index: 0, kind: input, shape index: {}]
  %s1 = inlined_call_operand.vmem [shape: f32[16,4], index: 1, kind: input, shape index: {}]
  %s2 = inlined_call_operand.vmem [shape: f32[1,4], index: 2, kind: input, shape index: {}]
  %s3 = inlined_call_operand.vmem [shape: f32[16,4], index: 3, kind: input, shape index: {}]
  %s4 = inlined_call_operand.vmem [shape: f32[1,16], index: 4, kind: input, shape index: {}]
  %s5 = inlined_call_operand.vmem [shape: f32[16,1], index: 5, kind: input, shape index: {}]
  %s6 = inlined_call_operand.<no memory space> [shape: f32[1,1], index: 6, kind: input, shape index: {}]
  %s7 = inlined_call_operand.hbm [shape: f32[2,16,256], index: 7, kind: output, shape index: {}]
  %s8 = sld [smem:[#allocation0]]
  $region42: #{tpu_custom_call.1} parent=0
    _
  %s10 = ssub.s32 1, %s8
  %s11 = scalar_select 0, %s10, %s8
  %v12 = vstv %s6
  %13 = vst [vmem:[#allocation2] sm:$0x1] %v12
  $region1: #{tpu_custom_call.1} parent=0
    #allocation3 [shape = 'u8[32768]{0}', space=vmem, size = 0x8000, scoped, tag = 'input window, operand 0, single buffered']
    #allocation4 [shape = 's32[1]{0}', space=sflag, size = 0x4, scoped, tag = 'scoped memory for tpu_custom_call.1']
    #allocation5 [shape = 's32[1]{0}', space=sflag, size = 0x4, scoped, tag = 'scoped memory for tpu_custom_call.1']
    #allocation6 [shape = 'u8[32768]{0}', space=vmem, size = 0x8000, scoped, tag = 'output window, operand 0, single buffered']
    %14 = vsyncpa [#allocation4], 0
    %15 = vsyncpa [#allocation5], 0
    // Predicated region
    $region2: #{tpu_custom_call.1} parent=1 // pred_check
      _
    $region3: #{tpu_custom_call.1} parent=1 // pred_check_branch
      %17 = sbr.rel (0) target = $region5
    $region4: #{tpu_custom_call.1} parent=1 // pred_region
      %s19 = ssub.s32 1024, 1024
      %20 = vsyncadd [#allocation4], %s19
      %s21 = sshll.u32 [#allocation3], 4
      %s22 = int_to_ptr.vmem [resolvable:$true] %s21
      %27 = dma.hbm_to_vmem [thread:$0]  %s0, 1024, %s22, [#allocation4], 256, 256, 16
    $region5: #{tpu_custom_call.1} parent=1 // pred_fallthru
      _
    // Predicated region
    $region6: #{tpu_custom_call.1} parent=1 // pred_check
      _
    $region7: #{tpu_custom_call.1} parent=1 // pred_check_branch
      %29 = sbr.rel (0) target = $region9
    $region8: #{tpu_custom_call.1} parent=1 // pred_region
      _
    $region9: #{tpu_custom_call.1} parent=1 // pred_fallthru
      _
    // Predicated region
    $region10: #{tpu_custom_call.1} parent=1 // pred_check
      _
    $region11: #{tpu_custom_call.1} parent=1 // pred_check_branch
      %31 = sbr.rel (0) target = $region13
    $region12: #{tpu_custom_call.1} parent=1 // pred_region
      _
    $region13: #{tpu_custom_call.1} parent=1 // pred_fallthru
      _
    // Predicated region
    $region14: #{tpu_custom_call.1} parent=1 // pred_check
      _
    $region15: #{tpu_custom_call.1} parent=1 // pred_check_branch
      %33 = sbr.rel (0) target = $region17
    $region16: #{tpu_custom_call.1} parent=1 // pred_region
      _
    $region17: #{tpu_custom_call.1} parent=1 // pred_fallthru
      _
    // Predicated region
    $region18: #{tpu_custom_call.1} parent=1 // pred_check
      _
    $region19: #{tpu_custom_call.1} parent=1 // pred_check_branch
      %35 = sbr.rel (0) target = $region21
    $region20: #{tpu_custom_call.1} parent=1 // pred_region
      _
    $region21: #{tpu_custom_call.1} parent=1 // pred_fallthru
      _
    // Predicated region
    $region22: #{tpu_custom_call.1} parent=1 // pred_check
      _
    $region23: #{tpu_custom_call.1} parent=1 // pred_check_branch
      %37 = sbr.rel (0) target = $region25
    $region24: #{tpu_custom_call.1} parent=1 // pred_region
      _
    $region25: #{tpu_custom_call.1} parent=1 // pred_fallthru
      _
    // Predicated region
    $region26: #{tpu_custom_call.1} parent=1 // pred_check
      _
    $region27: #{tpu_custom_call.1} parent=1 // pred_check_branch
      %39 = sbr.rel (0) target = $region29
    $region28: #{tpu_custom_call.1} parent=1 // pred_region
      _
    $region29: #{tpu_custom_call.1} parent=1 // pred_fallthru
      _
    // Predicated region
    $region30: #{tpu_custom_call.1} parent=1 // pred_check
      _
    $region31: #{tpu_custom_call.1} parent=1 // pred_check_branch
      %41 = sbr.rel (0) target = $region33
    $region32: #{tpu_custom_call.1} parent=1 // pred_region
      %42 = dma.done [#allocation4], 1024
    $region33: #{tpu_custom_call.1} parent=1 // pred_fallthru
      _
    %v43 = vld [vmem:[#allocation3] sm:$0xff]
    %v44 = vld [vmem:[#allocation3 + $0x8] sm:$0xff]
    %v45 = vld [vmem:[#allocation3 + $0x10] sm:$0xff]
    %v46 = vld [vmem:[#allocation3 + $0x18] sm:$0xff]
    %v47 = vld [vmem:[#allocation3 + $0x20] sm:$0xff]
    %v48 = vld [vmem:[#allocation3 + $0x28] sm:$0xff]
    %v49 = vld [vmem:[#allocation3 + $0x30] sm:$0xff]
    %v50 = vld [vmem:[#allocation3 + $0x38] sm:$0xff]
    %v51 = vadd.f32 %v43, %v44
    %52 = vadd.xlane.f32.xlu0 %v51
    %v53 = vpop.xlane.xlu0 %52
    %v54 = vadd.f32 %v45, %v46
    %55 = vadd.xlane.f32.xlu0 %v54
    %v56 = vpop.xlane.xlu0 %55
    %v57 = vadd.f32 %v47, %v48
    %58 = vadd.xlane.f32.xlu0 %v57
    %v59 = vpop.xlane.xlu0 %58
    %v60 = vadd.f32 %v49, %v50
    %61 = vadd.xlane.f32.xlu0 %v60
    %v62 = vpop.xlane.xlu0 %61
    %v63 = vmax.f32 %v43, %v44
    %64 = vmax.xlane.f32.xlu0 %v63
    %v65 = vpop.xlane.xlu0 %64
    %v66 = vmax.f32 %v45, %v46
    %67 = vmax.xlane.f32.xlu0 %v66
    %v68 = vpop.xlane.xlu0 %67
    %v69 = vmax.f32 %v47, %v48
    %70 = vmax.xlane.f32.xlu0 %v69
    %v71 = vpop.xlane.xlu0 %70
    %v72 = vmax.f32 %v49, %v50
    %73 = vmax.xlane.f32.xlu0 %v72
    %v74 = vpop.xlane.xlu0 %73
    %v75 = vmul.f32 %v53, 0.00390625
    %v76 = vmul.f32 %v56, 0.00390625
    %v77 = vmul.f32 %v59, 0.00390625
    %v78 = vmul.f32 %v62, 0.00390625
    %v79 = vadd.f32 %v75, %v65
    %v80 = vadd.f32 %v76, %v68
    %v81 = vadd.f32 %v77, %v71
    %v82 = vadd.f32 %v78, %v74
    %v83 = vld [vmem:[%s1] sm:$0xff]
    %v84 = vld [vmem:[%s1 + $0x8] sm:$0xff]
    %v85 = vld [vmem:[%s2] sm:$0x1]
    %v86 = vld [vmem:[%s3] sm:$0xff]
    %v87 = vld [vmem:[%s3 + $0x8] sm:$0xff]
    %v88 = vld [vmem:[%s4] sm:$0x1]
    %v89 = vmul.f32 %v79, %v83
    %v90 = vmul.f32 %v80, %v84
    %v91 = vmul.f32 %v81, %v83
    %v92 = vmul.f32 %v82, %v84
    %vm93 = vcmask 31744
    %v94 = vsel %vm93, %v89, 0.0
    %v95 = vsel %vm93, %v90, 0.0
    %v96 = vadd.f32 %v94, %v95
    %v97 = vrot.slane %v96, 4
    %v98 = vadd.f32 %v96, %v97
    %v99 = vrot.slane %v98, 2
    %v100 = vadd.f32 %v98, %v99
    %v101 = vrot.slane %v100, 1
    %v102 = vadd.f32 %v100, %v101
    %v103 = vsel %vm93, %v91, 0.0
    %v104 = vsel %vm93, %v92, 0.0
    %v105 = vadd.f32 %v103, %v104
    %v106 = vrot.slane %v105, 4
    %v107 = vadd.f32 %v105, %v106
    %v108 = vrot.slane %v107, 2
    %v109 = vadd.f32 %v107, %v108
    %v110 = vrot.slane %v109, 1
    %v111 = vadd.f32 %v109, %v110
    %v113 = vlaneseq
    %v114 = vshrl.u32 %v113, 7
    %v115 = vsub.s32 0, %v114
    %v116 = vrot.slane %v85, %v115
    %v118 = vadd.f32 %v102, %v116
    %v119 = vadd.f32 %v111, %v116
    %v120 = vmax.f32 %v118, 0.0
    %v121 = vmax.f32 %v119, 0.0
    %v122 = vlaneseq
    %v123 = vshrl.u32 %v122, 7
    %v124 = vsub.s32 0, %v123
    %v125 = vrot.slane %v120, %v124
    %v126 = vlaneseq
    %v127 = vshrl.u32 %v126, 7
    %v128 = vsub.s32 0, %v127
    %v129 = vrot.slane %v121, %v128
    %v130 = vmul.f32 %v125, %v86
    %v131 = vmul.f32 %v125, %v87
    %v132 = vmul.f32 %v129, %v86
    %v133 = vmul.f32 %v129, %v87
    %v134 = vsel %vm93, %v130, 0.0
    %135 = vadd.xlane.f32.xlu0 %v134
    %v136 = vpop.xlane.xlu0 %135
    %v137 = vsel %vm93, %v131, 0.0
    %138 = vadd.xlane.f32.xlu0 %v137
    %v139 = vpop.xlane.xlu0 %138
    %v140 = vsel %vm93, %v132, 0.0
    %141 = vadd.xlane.f32.xlu0 %v140
    %v142 = vpop.xlane.xlu0 %141
    %v143 = vsel %vm93, %v133, 0.0
    %144 = vadd.xlane.f32.xlu0 %v143
    %v145 = vpop.xlane.xlu0 %144
    %v147 = vlaneseq
    %v148 = vshrl.u32 %v147, 7
    %v149 = vsub.s32 0, %v148
    %v150 = vrot.slane %v88, %v149
    %152 = vbcast.lane.b32.xlu0 %v150, 256
    %v153 = vpop.permute.xlu0 %152
    %s155 = sor.u32 256, 8
    %156 = vbcast.lane.b32.xlu0 %v150, %s155
    %v157 = vpop.permute.xlu0 %156
    %v160 = vadd.f32 %v136, %v153
    %v161 = vadd.f32 %v139, %v157
    %v162 = vadd.f32 %v142, %v153
    %v163 = vadd.f32 %v145, %v157
    %v164 = vxor.u32 %v160, 2147483648
    %v165 = vxor.u32 %v161, 2147483648
    %v166 = vxor.u32 %v162, 2147483648
    %v167 = vxor.u32 %v163, 2147483648
    %v168 = vmul.f32 %v164, 1.442695
    %v169 = vpow.pop %v168
    %v170 = vmul.f32 %v165, 1.442695
    %v171 = vpow.pop %v170
    %v172 = vmul.f32 %v166, 1.442695
    %v173 = vpow.pop %v172
    %v174 = vmul.f32 %v167, 1.442695
    %v175 = vpow.pop %v174
    %v176 = vadd.f32 %v169, 1.0
    %v177 = vadd.f32 %v171, 1.0
    %v178 = vadd.f32 %v173, 1.0
    %v179 = vadd.f32 %v175, 1.0
    %v180 = vrcp.pop %v176
    %v181 = vmul.f32 1.0, %v180
    %v182 = vrcp.pop %v177
    %v183 = vmul.f32 1.0, %v182
    %v184 = vrcp.pop %v178
    %v185 = vmul.f32 1.0, %v184
    %v186 = vrcp.pop %v179
    %v187 = vmul.f32 1.0, %v186
    %v188 = vmul.f32 %v181, 1.442695
    %v189 = vpow.pop %v188
    %v190 = vmul.f32 %v183, 1.442695
    %v191 = vpow.pop %v190
    %v192 = vmul.f32 %v185, 1.442695
    %v193 = vpow.pop %v192
    %v194 = vmul.f32 %v187, 1.442695
    %v195 = vpow.pop %v194
    %v196 = vld [vmem:[%s5] sm:$0xff]
    %v197 = vld [vmem:[%s5 + $0x8] sm:$0xff]
    %v198 = vld [vmem:[#allocation2] sm:$0x1]
    %200 = vset.pattern.permute.xlu0 0
    %201 = vperm.xlu0 %200, %v196
    %v202 = vpop.permute.xlu0 %201
    %205 = vset.pattern.permute.xlu0 0
    %206 = vperm.xlu0 %205, %v197
    %v207 = vpop.permute.xlu0 %206
    %v209 = vmul.f32 %v43, %v202
    %v210 = vmul.f32 %v44, %v202
    %v211 = vmul.f32 %v45, %v207
    %v212 = vmul.f32 %v46, %v207
    %v213 = vmul.f32 %v47, %v202
    %v214 = vmul.f32 %v48, %v202
    %v215 = vmul.f32 %v49, %v207
    %v216 = vmul.f32 %v50, %v207
    %v217 = vadd.f32 %v209, %v211
    %v218 = vrot.slane %v217, 4
    %v219 = vadd.f32 %v217, %v218
    %v220 = vrot.slane %v219, 2
    %v221 = vadd.f32 %v219, %v220
    %v222 = vrot.slane %v221, 1
    %v223 = vadd.f32 %v221, %v222
    %v224 = vadd.f32 %v210, %v212
    %v225 = vrot.slane %v224, 4
    %v226 = vadd.f32 %v224, %v225
    %v227 = vrot.slane %v226, 2
    %v228 = vadd.f32 %v226, %v227
    %v229 = vrot.slane %v228, 1
    %v230 = vadd.f32 %v228, %v229
    %v231 = vadd.f32 %v213, %v215
    %v232 = vrot.slane %v231, 4
    %v233 = vadd.f32 %v231, %v232
    %v234 = vrot.slane %v233, 2
    %v235 = vadd.f32 %v233, %v234
    %v236 = vrot.slane %v235, 1
    %v237 = vadd.f32 %v235, %v236
    %v238 = vadd.f32 %v214, %v216
    %v239 = vrot.slane %v238, 4
    %v240 = vadd.f32 %v238, %v239
    %v241 = vrot.slane %v240, 2
    %v242 = vadd.f32 %v240, %v241
    %v243 = vrot.slane %v242, 1
    %v244 = vadd.f32 %v242, %v243
    %246 = vset.pattern.permute.xlu0 0
    %247 = vperm.xlu0 %246, %v198
    %v248 = vpop.permute.xlu0 %247
    %v250 = vlaneseq
    %v251 = vshrl.u32 %v250, 7
    %v252 = vsub.s32 0, %v251
    %v253 = vrot.slane %v248, %v252
    %v254 = vadd.f32 %v223, %v253
    %v255 = vadd.f32 %v230, %v253
    %v256 = vadd.f32 %v237, %v253
    %v257 = vadd.f32 %v244, %v253
    %v258 = vxor.u32 %v254, 2147483648
    %v259 = vxor.u32 %v255, 2147483648
    %v260 = vxor.u32 %v256, 2147483648
    %v261 = vxor.u32 %v257, 2147483648
    %v262 = vmul.f32 %v258, 1.442695
    %v263 = vpow.pop %v262
    %v264 = vmul.f32 %v259, 1.442695
    %v265 = vpow.pop %v264
    %v266 = vmul.f32 %v260, 1.442695
    %v267 = vpow.pop %v266
    %v268 = vmul.f32 %v261, 1.442695
    %v269 = vpow.pop %v268
    %v270 = vadd.f32 %v263, 1.0
    %v271 = vadd.f32 %v265, 1.0
    %v272 = vadd.f32 %v267, 1.0
    %v273 = vadd.f32 %v269, 1.0
    %v274 = vrcp.pop %v270
    %v275 = vmul.f32 1.0, %v274
    %v276 = vrcp.pop %v271
    %v277 = vmul.f32 1.0, %v276
    %v278 = vrcp.pop %v272
    %v279 = vmul.f32 1.0, %v278
    %v280 = vrcp.pop %v273
    %v281 = vmul.f32 1.0, %v280
    %v282 = vmul.f32 %v275, 1.442695
    %v283 = vpow.pop %v282
    %v284 = vmul.f32 %v277, 1.442695
    %v285 = vpow.pop %v284
    %v286 = vmul.f32 %v279, 1.442695
    %v287 = vpow.pop %v286
    %v288 = vmul.f32 %v281, 1.442695
    %v289 = vpow.pop %v288
    %291 = vset.pattern.permute.xlu0 0
    %292 = vperm.xlu0 %291, %v189
    %v293 = vpop.permute.xlu0 %292
    %296 = vset.pattern.permute.xlu0 0
    %297 = vperm.xlu0 %296, %v191
    %v298 = vpop.permute.xlu0 %297
    %301 = vset.pattern.permute.xlu0 0
    %302 = vperm.xlu0 %301, %v193
    %v303 = vpop.permute.xlu0 %302
    %306 = vset.pattern.permute.xlu0 0
    %307 = vperm.xlu0 %306, %v195
    %v308 = vpop.permute.xlu0 %307
    %v310 = vadd.f32 %v293, %v283
    %v311 = vadd.f32 %v293, %v285
    %v312 = vadd.f32 %v298, %v283
    %v313 = vadd.f32 %v298, %v285
    %v314 = vadd.f32 %v303, %v287
    %v315 = vadd.f32 %v303, %v289
    %v316 = vadd.f32 %v308, %v287
    %v317 = vadd.f32 %v308, %v289
    %v318 = vmul.f32 %v43, %v310
    %v319 = vmul.f32 %v44, %v311
    %v320 = vmul.f32 %v45, %v312
    %v321 = vmul.f32 %v46, %v313
    %v322 = vmul.f32 %v47, %v314
    %v323 = vmul.f32 %v48, %v315
    %v324 = vmul.f32 %v49, %v316
    %v325 = vmul.f32 %v50, %v317
    %326 = vst [vmem:[#allocation6] sm:$0xff] %v318
    %327 = vst [vmem:[#allocation6 + $0x8] sm:$0xff] %v319
    %328 = vst [vmem:[#allocation6 + $0x10] sm:$0xff] %v320
    %329 = vst [vmem:[#allocation6 + $0x18] sm:$0xff] %v321
    %330 = vst [vmem:[#allocation6 + $0x20] sm:$0xff] %v322
    %331 = vst [vmem:[#allocation6 + $0x28] sm:$0xff] %v323
    %332 = vst [vmem:[#allocation6 + $0x30] sm:$0xff] %v324
    %333 = vst [vmem:[#allocation6 + $0x38] sm:$0xff] %v325
    // Predicated region
    $region34: #{tpu_custom_call.1} parent=1 // pred_check
      _
    $region35: #{tpu_custom_call.1} parent=1 // pred_check_branch
      %335 = sbr.rel (0) target = $region37
    $region36: #{tpu_custom_call.1} parent=1 // pred_region
      %s337 = ssub.s32 1024, 1024
      %338 = vsyncadd [#allocation5], %s337
      %s339 = sshll.u32 [#allocation6], 4
      %s340 = int_to_ptr.vmem [resolvable:$true] %s339
      %345 = dma.vmem_to_hbm [thread:$0]  %s340, 1024, %s7, [#allocation5], 256, 256, 16
    $region37: #{tpu_custom_call.1} parent=1 // pred_fallthru
      _
    // Predicated region
    $region38: #{tpu_custom_call.1} parent=1 // pred_check
      _
    $region39: #{tpu_custom_call.1} parent=1 // pred_check_branch
      %347 = sbr.rel (0) target = $region41
    $region40: #{tpu_custom_call.1} parent=1 // pred_region
      %348 = dma.done [#allocation5], 1024
    $region41: #{tpu_custom_call.1} parent=1 // pred_fallthru
      _
    %349 = vsyncpa [#allocation4], 1
    %350 = vsyncpa [#allocation5], 1

</llo_original>
